<compile_context>
chip_gen: v6e
topology: v6e:2x2x1
jax: 0.10.0
libtpu: 0.0.40
codegen_flags: <defaults>
</compile_context>

<pallas_src>
import functools
import math

import jax
import jax.numpy as jnp
import numpy as np
from jax import lax
from jax.experimental import pallas as pl
from jax.experimental.pallas import tpu as pltpu


def _round_up(v, m):
    return (v + m - 1) // m * m


def _make_kernel(*, shifts, c_in_pad, c_out_pad, c_out, length, b_tile, sub,
                 compute_dtype, fuse_down, wd_sep):
    K = len(shifts)
    L = length
    total = b_tile * L
    tap_rows_1 = K * c_in_pad          # rows of s1 holding the shifted-x taps
    tap_rows_2 = K * c_out_pad         # rows of s2 holding the shifted-h1 taps

    def kernel(*refs):
        if wd_sep:
            x_ref, w1_ref, w2_ref, wd_ref, bd_ref, o_ref, s1_ref, s2_ref = refs
        else:
            x_ref, w1_ref, w2_ref, o_ref, s1_ref, s2_ref = refs

        x = x_ref[...]                                   # (c_in_pad, total)

        # Lane position within each length-L window (batch elements are
        # concatenated along lanes).  Used to mask rolled taps so the conv's
        # zero padding is reproduced and no data leaks across batch windows.
        lane_t = lax.broadcasted_iota(jnp.int32, (1, total), 1) % L

        # Folded-bias row block: a single ones row followed by zero rows.
        # Written every step (cheap) instead of only at program_id == 0, so it
        # stays correct when the parallel batch axis is sharded across cores.
        bias_rows = (lax.broadcasted_iota(jnp.int32, (sub, total), 0)
                     == 0).astype(compute_dtype)
        s1_ref[tap_rows_1:, :] = bias_rows
        s2_ref[tap_rows_2:, :] = bias_rows

        def shifted_tap(v, s):
            # out[:, b*L + t] = v[:, b*L + (t - s)] when 0 <= t - s < L, else 0.
            if s == 0:
                return v
            rolled = pltpu.roll(v, shift=s % total, axis=1)   # XLU rotate
            mask = (lane_t >= s) if s > 0 else (lane_t < L + s)
            return jnp.where(mask, rolled, jnp.zeros((), v.dtype))

        # ---- conv1 (+ fused 1x1 downsample, biases folded): ONE MXU matmul --
        for k, s in enumerate(shifts):
            s1_ref[k * c_in_pad:(k + 1) * c_in_pad, :] = shifted_tap(x, s)
        out1 = jnp.dot(w1_ref[...], s1_ref[...],
                       preferred_element_type=jnp.float32)
        h1 = jnp.maximum(out1[:c_out_pad], 0.0)          # (c_out_pad, total) f32
        # dropout: identity at inference time

        if fuse_down:
            res = out1[c_out_pad:c_out_pad + c_out]      # Wd @ x + bd, f32
        elif wd_sep:
            res = (jnp.dot(wd_ref[...], x, preferred_element_type=jnp.float32)
                   + bd_ref[...])
        else:
            # Identity residual (C_in == C_out).  Exact with f32 compute_dtype;
            # with bf16 MXU inputs the residual is rounded to bf16 here.
            res = x[:c_out].astype(jnp.float32)

        # ---- conv2 (bias folded): ONE MXU matmul ----------------------------
        h1c = h1.astype(compute_dtype)
        for k, s in enumerate(shifts):
            s2_ref[k * c_out_pad:(k + 1) * c_out_pad, :] = shifted_tap(h1c, s)
        h2 = jnp.maximum(jnp.dot(w2_ref[...], s2_ref[...],
                                 preferred_element_type=jnp.float32), 0.0)
        # dropout: identity at inference time

        o_ref[...] = jnp.maximum(h2 + res, 0.0)

    return kernel


def temporal_block_pallas(x, params, *, kernel_size, dilation, padding,
                          batch_tile=None, compute_dtype=jnp.float32):
    """Fused TemporalBlock forward (eval mode).

    x: (N, C_in, L) float32; returns (N, C_out, L) float32.  L should be a
    multiple of 128 (lane-dense) unless a single grid step covers the batch.
    """
    N, C_in, L = x.shape
    C_out = params["w1"].shape[0]
    K = kernel_size
    # The module's residual add requires the conv output length to equal L.
    assert dilation * (K - 1) == 2 * padding, (
        "residual add requires 2*padding == dilation*(kernel_size-1)")

    sub = 8 if jnp.dtype(compute_dtype).itemsize == 4 else 16
    c_in_pad = _round_up(C_in, sub)
    c_out_pad = _round_up(C_out, sub)

    # Static per-tap shift: output column t reads input column (t - shift).
    shifts = tuple(padding - k * dilation for k in range(K))
    assert all(abs(s) < L for s in shifts), "padding/dilation too large for L"

    if batch_tile is None:
        # Largest divisor of N that still leaves >= 2 grid steps (so the
        # "parallel" batch axis can be split across v7x's two TensorCores),
        # capped at 8 to amortize per-grid-step overhead on v5e/v6e.
        cap = min(8, max(1, N // 2))
        batch_tile = max((d for d in range(1, cap + 1) if N % d == 0),
                         default=1)
    b_tile = batch_tile
    assert N % b_tile == 0
    total = b_tile * L
    assert L % 128 == 0 or b_tile == N, "keep the lane axis 128-aligned"

    wd = params.get("wd", None)
    have_down = wd is not None
    fuse_down = have_down and (0 in shifts)   # zero-shift tap exists (K odd)
    wd_sep = have_down and not fuse_down

    # ---- input: channel-pad x and lay it out lane-dense as (C_in_pad, N*L).
    xp = jnp.pad(x, ((0, 0), (0, c_in_pad - C_in), (0, 0)))
    xw = xp.transpose(1, 0, 2).reshape(c_in_pad, N * L).astype(compute_dtype)

    def _vec(b):
        return jnp.reshape(b, (-1,)).astype(jnp.float32)

    b1 = _vec(params["b1"])
    b2 = _vec(params["b2"])

    # ---- conv1 weight: tap-stacked, channel-padded, with the 1x1 downsample
    #      and both biases folded in (bias multiplies the appended ones row).
    R1 = K * c_in_pad + sub
    rows1 = c_out_pad + (C_out if fuse_down else 0)
    w1 = params["w1"].astype(jnp.float32)
    W1e = jnp.zeros((rows1, R1), jnp.float32)
    for k in range(K):
        W1e = W1e.at[:C_out, k * c_in_pad:k * c_in_pad + C_in].set(w1[:, :, k])
    W1e = W1e.at[:C_out, K * c_in_pad].set(b1)
    if fuse_down:
        k0 = shifts.index(0)
        W1e = W1e.at[c_out_pad:rows1,
                     k0 * c_in_pad:k0 * c_in_pad + C_in].set(
                         params["wd"][:, :, 0].astype(jnp.float32))
        W1e = W1e.at[c_out_pad:rows1, K * c_in_pad].set(_vec(params["bd"]))

    # ---- conv2 weight: tap-stacked, channel-padded, bias folded.
    R2 = K * c_out_pad + sub
    w2 = params["w2"].astype(jnp.float32)
    W2e = jnp.zeros((C_out, R2), jnp.float32)
    for k in range(K):
        W2e = W2e.at[:, k * c_out_pad:k * c_out_pad + C_out].set(w2[:, :, k])
    W2e = W2e.at[:, K * c_out_pad].set(b2)

    W1e = W1e.astype(compute_dtype)
    W2e = W2e.astype(compute_dtype)

    inputs = [xw, W1e, W2e]
    in_specs = [
        pl.BlockSpec((c_in_pad, total), lambda b: (0, b)),
        pl.BlockSpec((rows1, R1), lambda b: (0, 0)),
        pl.BlockSpec((C_out, R2), lambda b: (0, 0)),
    ]
    if wd_sep:  # downsample present but no zero-shift tap: separate matmul
        wd_pad = jnp.zeros((C_out, c_in_pad), jnp.float32)
        wd_pad = wd_pad.at[:, :C_in].set(params["wd"][:, :, 0])
        inputs += [wd_pad.astype(compute_dtype),
                   _vec(params["bd"]).reshape(C_out, 1)]
        in_specs += [pl.BlockSpec((C_out, c_in_pad), lambda b: (0, 0)),
                     pl.BlockSpec((C_out, 1), lambda b: (0, 0))]

    kernel = _make_kernel(shifts=shifts, c_in_pad=c_in_pad,
                          c_out_pad=c_out_pad, c_out=C_out, length=L,
                          b_tile=b_tile, sub=sub, compute_dtype=compute_dtype,
                          fuse_down=fuse_down, wd_sep=wd_sep)

    out_flat = pl.pallas_call(
        kernel,
        out_shape=jax.ShapeDtypeStruct((C_out, N * L), jnp.float32),
        grid_spec=pltpu.PrefetchScalarGridSpec(
            num_scalar_prefetch=0,
            grid=(N // b_tile,),
            in_specs=in_specs,
            out_specs=pl.BlockSpec((C_out, total), lambda b: (0, b)),
            scratch_shapes=[
                pltpu.VMEM((R1, total), compute_dtype),  # stacked conv1 operand
                pltpu.VMEM((R2, total), compute_dtype),  # stacked conv2 operand
            ],
        ),
        compiler_params=pltpu.CompilerParams(
            dimension_semantics=("parallel",)),   # batch blocks independent
    )(*inputs)

    # (C_out, N*L) -> (N, C_out, L): wrapper-side layout plumbing only.
    return out_flat.reshape(C_out, N, L).transpose(1, 0, 2)


# ----------------------------- reference ----------------------------------
def _conv1d_ref(x, w, b, dilation, padding):
    out = lax.conv_general_dilated(
        x, w, window_strides=(1,), padding=[(padding, padding)],
        rhs_dilation=(dilation,), dimension_numbers=("NCH", "OIH", "NCH"))
    return out + jnp.reshape(b, (1, -1, 1))


def temporal_block_ref(x, params, *, kernel_size, dilation, padding):
    h1 = jax.nn.relu(_conv1d_ref(x, params["w1"], params["b1"],
                                 dilation, padding))
    h2 = jax.nn.relu(_conv1d_ref(h1, params["w2"], params["b2"],
                                 dilation, padding))
    if params.get("wd") is not None:
        res = _conv1d_ref(x, params["wd"], params["bd"], 1, 0)
    else:
        res = x
    return jax.nn.relu(h2 + res)


if __name__ == "__main__":
    # Small shapes consistent with the module's forward:
    # batch=2, input_channels=4, output_channels=8, seq_len=128 (lane-dense),
    # kernel_size=3, stride=1, dilation=2, padding=2 (so output length == L,
    # which the residual add in forward() requires).
    N, C_in, C_out, L = 2, 4, 8, 128
    K, dilation, padding = 3, 2, 2
    assert 2 * padding == dilation * (K - 1)

    key = jax.random.PRNGKey(0)
    k_x, k_w1, k_b1, k_w2, k_b2, k_wd, k_bd = jax.random.split(key, 7)

    # Deterministic parameter init mirroring the module:
    # weights ~ N(0, 0.01); biases ~ PyTorch-default U(-1/sqrt(fan_in), +).
    bound1 = 1.0 / math.sqrt(C_in * K)
    bound2 = 1.0 / math.sqrt(C_out * K)
    boundd = 1.0 / math.sqrt(C_in * 1)
    params = {
        "w1": 0.01 * jax.random.normal(k_w1, (C_out, C_in, K), jnp.float32),
        "b1": jax.random.uniform(k_b1, (C_out, 1), jnp.float32,
                                 -bound1, bound1),
        "w2": 0.01 * jax.random.normal(k_w2, (C_out, C_out, K), jnp.float32),
        "b2": jax.random.uniform(k_b2, (C_out, 1), jnp.float32,
                                 -bound2, bound2),
        "wd": 0.01 * jax.random.normal(k_wd, (C_out, C_in, 1), jnp.float32),
        "bd": jax.random.uniform(k_bd, (C_out, 1), jnp.float32,
                                 -boundd, boundd),
    }

    x = jax.random.normal(k_x, (N, C_in, L), jnp.float32)

    run = functools.partial(temporal_block_pallas, kernel_size=K,
                            dilation=dilation, padding=padding)
    out = jax.block_until_ready(jax.jit(run)(x, params))

    ref = temporal_block_ref(x, params, kernel_size=K,
                             dilation=dilation, padding=padding)
    np.testing.assert_allclose(np.asarray(out), np.asarray(ref),
                               rtol=1e-5, atol=2e-5)
    assert out.shape == (N, C_out, L)
    print("KERNEL_OK")
</pallas_src>

<mosaic_0001>
module attributes {stable_mosaic.version = 11 : i64} {
  func.func @kernel(%arg0: i32, %arg1: memref<8x128xf32, #tpu.memory_space<vmem>>, %arg2: memref<16x32xf32, #tpu.memory_space<vmem>>, %arg3: memref<8x32xf32, #tpu.memory_space<vmem>>, %arg4: memref<8x128xf32, #tpu.memory_space<vmem>>, %arg5: memref<32x128xf32, #tpu.memory_space<vmem>>, %arg6: memref<32x128xf32, #tpu.memory_space<vmem>>) attributes {dimension_semantics = [#tpu.dimension_semantics<parallel>], iteration_bounds = array<i64: 2>, scalar_prefetch = 0 : i64, scratch_operands = 2 : i64, tpu.core_type = #tpu.core_type<tc>, window_params = [{transform_indices = @transform_0, window_bounds = array<i64: 8, 128>}, {pipeline_mode = #tpu.pipeline_mode<synchronous>, transform_indices = @transform_1, window_bounds = array<i64: 16, 32>}, {pipeline_mode = #tpu.pipeline_mode<synchronous>, transform_indices = @transform_2, window_bounds = array<i64: 8, 32>}, {transform_indices = @transform_3, window_bounds = array<i64: 8, 128>}]} {
    %c0 = arith.constant 0 : index
    %c0_0 = arith.constant 0 : index
    %0 = vector.load %arg1[%c0, %c0_0] : memref<8x128xf32, #tpu.memory_space<vmem>>, vector<8x128xf32>
    %1 = tpu.iota {dimensions = array<i32: 1>} : vector<1x128xi32>
    %c128_i32 = arith.constant 128 : i32
    %c0_i32 = arith.constant 0 : i32
    %2 = arith.cmpi eq, %c128_i32, %c0_i32 : i32
    %c1_i32 = arith.constant 1 : i32
    %3 = arith.select %2, %c1_i32, %c128_i32 : i32
    %4 = vector.broadcast %3 : i32 to vector<1x128xi32>
    %5 = arith.remsi %1, %4 : vector<1x128xi32>
    %c0_i32_1 = arith.constant 0 : i32
    %6 = vector.broadcast %c0_i32_1 : i32 to vector<1x128xi32>
    %7 = arith.cmpi ne, %5, %6 : vector<1x128xi32>
    %c0_i32_2 = arith.constant 0 : i32
    %8 = vector.broadcast %c0_i32_2 : i32 to vector<1x128xi32>
    %9 = arith.cmpi slt, %5, %8 : vector<1x128xi32>
    %c0_i32_3 = arith.constant 0 : i32
    %10 = arith.cmpi slt, %3, %c0_i32_3 : i32
    %11 = vector.broadcast %10 : i1 to vector<1x128xi1>
    %12 = vector.broadcast %11 : vector<1x128xi1> to vector<1x128xi1>
    %13 = arith.xori %9, %12 : vector<1x128xi1>
    %14 = arith.andi %13, %7 : vector<1x128xi1>
    %15 = vector.broadcast %3 : i32 to vector<1x128xi32>
    %16 = arith.addi %5, %15 : vector<1x128xi32>
    %17 = arith.select %14, %16, %5 : vector<1x128xi1>, vector<1x128xi32>
    %18 = tpu.iota {dimensions = array<i32: 0>} : vector<8x128xi32>
    %c0_i32_4 = arith.constant 0 : i32
    %19 = vector.broadcast %c0_i32_4 : i32 to vector<8x128xi32>
    %20 = arith.cmpi eq, %18, %19 : vector<8x128xi32>
    %21 = arith.extui %20 : vector<8x128xi1> to vector<8x128xi32>
    %22 = arith.sitofp %21 : vector<8x128xi32> to vector<8x128xf32>
    %c24 = arith.constant 24 : index
    %c0_5 = arith.constant 0 : index
    %23 = vector.load %arg5[%c24, %c0_5] : memref<32x128xf32, #tpu.memory_space<vmem>>, vector<8x128xf32>
    tpu.vector_store %arg5[%c24, %c0_5], %22 {strides = array<i32>} : memref<32x128xf32, #tpu.memory_space<vmem>>, vector<8x128xf32>,
    %c24_6 = arith.constant 24 : index
    %c0_7 = arith.constant 0 : index
    %24 = vector.load %arg6[%c24_6, %c0_7] : memref<32x128xf32, #tpu.memory_space<vmem>>, vector<8x128xf32>
    tpu.vector_store %arg6[%c24_6, %c0_7], %22 {strides = array<i32>} : memref<32x128xf32, #tpu.memory_space<vmem>>, vector<8x128xf32>,
    %c2_i32 = arith.constant 2 : i32
    %25 = tpu.dynamic_rotate %0 by %c2_i32 dim 1 : vector<8x128xf32>, i32 -> vector<8x128xf32>
    %c2_i32_8 = arith.constant 2 : i32
    %26 = vector.broadcast %c2_i32_8 : i32 to vector<1x128xi32>
    %27 = arith.cmpi sge, %17, %26 : vector<1x128xi32>
    %cst = arith.constant 0.000000e+00 : f32
    %28 = vector.shape_cast %27 : vector<1x128xi1> to vector<1x128xi1>
    %29 = vector.broadcast %28 : vector<1x128xi1> to vector<8x128xi1>
    %30 = vector.broadcast %cst : f32 to vector<8x128xf32>
    %31 = arith.select %29, %25, %30 : vector<8x128xi1>, vector<8x128xf32>
    %c0_9 = arith.constant 0 : index
    %c0_10 = arith.constant 0 : index
    %32 = vector.load %arg5[%c0_9, %c0_10] : memref<32x128xf32, #tpu.memory_space<vmem>>, vector<8x128xf32>
    tpu.vector_store %arg5[%c0_9, %c0_10], %31 {strides = array<i32>} : memref<32x128xf32, #tpu.memory_space<vmem>>, vector<8x128xf32>,
    %c8 = arith.constant 8 : index
    %c0_11 = arith.constant 0 : index
    %33 = vector.load %arg5[%c8, %c0_11] : memref<32x128xf32, #tpu.memory_space<vmem>>, vector<8x128xf32>
    tpu.vector_store %arg5[%c8, %c0_11], %0 {strides = array<i32>} : memref<32x128xf32, #tpu.memory_space<vmem>>, vector<8x128xf32>,
    %c126_i32 = arith.constant 126 : i32
    %34 = tpu.dynamic_rotate %0 by %c126_i32 dim 1 : vector<8x128xf32>, i32 -> vector<8x128xf32>
    %c126_i32_12 = arith.constant 126 : i32
    %35 = vector.broadcast %c126_i32_12 : i32 to vector<1x128xi32>
    %36 = arith.cmpi slt, %17, %35 : vector<1x128xi32>
    %cst_13 = arith.constant 0.000000e+00 : f32
    %37 = vector.shape_cast %36 : vector<1x128xi1> to vector<1x128xi1>
    %38 = vector.broadcast %37 : vector<1x128xi1> to vector<8x128xi1>
    %39 = vector.broadcast %cst_13 : f32 to vector<8x128xf32>
    %40 = arith.select %38, %34, %39 : vector<8x128xi1>, vector<8x128xf32>
    %c16 = arith.constant 16 : index
    %c0_14 = arith.constant 0 : index
    %41 = vector.load %arg5[%c16, %c0_14] : memref<32x128xf32, #tpu.memory_space<vmem>>, vector<8x128xf32>
    tpu.vector_store %arg5[%c16, %c0_14], %40 {strides = array<i32>} : memref<32x128xf32, #tpu.memory_space<vmem>>, vector<8x128xf32>,
    %c0_15 = arith.constant 0 : index
    %c0_16 = arith.constant 0 : index
    %42 = vector.load %arg2[%c0_15, %c0_16] : memref<16x32xf32, #tpu.memory_space<vmem>>, vector<16x32xf32>
    %c0_17 = arith.constant 0 : index
    %c0_18 = arith.constant 0 : index
    %43 = vector.load %arg5[%c0_17, %c0_18] : memref<32x128xf32, #tpu.memory_space<vmem>>, vector<32x128xf32>
    %cst_19 = arith.constant dense<0.000000e+00> : vector<16x128xf32>
    %44 = tpu.matmul %42, %43, %cst_19 {dimension_numbers = #tpu.dot_dimension_numbers<[1], [0], [0], [1], [0, 0, 1, 1], [], []>} : vector<16x32xf32>, vector<32x128xf32>, vector<16x128xf32> -> vector<16x128xf32>
    %45 = vector.extract_strided_slice %44 {offsets = [0, 0], sizes = [8, 128], strides = [1, 1]} : vector<16x128xf32> to vector<8x128xf32>
    %cst_20 = arith.constant 0.000000e+00 : f32
    %46 = vector.broadcast %cst_20 : f32 to vector<8x128xf32>
    %47 = arith.maximumf %45, %46 : vector<8x128xf32>
    %48 = vector.extract_strided_slice %44 {offsets = [8, 0], sizes = [8, 128], strides = [1, 1]} : vector<16x128xf32> to vector<8x128xf32>
    %c2_i32_21 = arith.constant 2 : i32
    %49 = tpu.dynamic_rotate %47 by %c2_i32_21 dim 1 : vector<8x128xf32>, i32 -> vector<8x128xf32>
    %c2_i32_22 = arith.constant 2 : i32
    %50 = vector.broadcast %c2_i32_22 : i32 to vector<1x128xi32>
    %51 = arith.cmpi sge, %17, %50 : vector<1x128xi32>
    %cst_23 = arith.constant 0.000000e+00 : f32
    %52 = vector.shape_cast %51 : vector<1x128xi1> to vector<1x128xi1>
    %53 = vector.broadcast %52 : vector<1x128xi1> to vector<8x128xi1>
    %54 = vector.broadcast %cst_23 : f32 to vector<8x128xf32>
    %55 = arith.select %53, %49, %54 : vector<8x128xi1>, vector<8x128xf32>
    %c0_24 = arith.constant 0 : index
    %c0_25 = arith.constant 0 : index
    %56 = vector.load %arg6[%c0_24, %c0_25] : memref<32x128xf32, #tpu.memory_space<vmem>>, vector<8x128xf32>
    tpu.vector_store %arg6[%c0_24, %c0_25], %55 {strides = array<i32>} : memref<32x128xf32, #tpu.memory_space<vmem>>, vector<8x128xf32>,
    %c8_26 = arith.constant 8 : index
    %c0_27 = arith.constant 0 : index
    %57 = vector.load %arg6[%c8_26, %c0_27] : memref<32x128xf32, #tpu.memory_space<vmem>>, vector<8x128xf32>
    tpu.vector_store %arg6[%c8_26, %c0_27], %47 {strides = array<i32>} : memref<32x128xf32, #tpu.memory_space<vmem>>, vector<8x128xf32>,
    %c126_i32_28 = arith.constant 126 : i32
    %58 = tpu.dynamic_rotate %47 by %c126_i32_28 dim 1 : vector<8x128xf32>, i32 -> vector<8x128xf32>
    %c126_i32_29 = arith.constant 126 : i32
    %59 = vector.broadcast %c126_i32_29 : i32 to vector<1x128xi32>
    %60 = arith.cmpi slt, %17, %59 : vector<1x128xi32>
    %cst_30 = arith.constant 0.000000e+00 : f32
    %61 = vector.shape_cast %60 : vector<1x128xi1> to vector<1x128xi1>
    %62 = vector.broadcast %61 : vector<1x128xi1> to vector<8x128xi1>
    %63 = vector.broadcast %cst_30 : f32 to vector<8x128xf32>
    %64 = arith.select %62, %58, %63 : vector<8x128xi1>, vector<8x128xf32>
    %c16_31 = arith.constant 16 : index
    %c0_32 = arith.constant 0 : index
    %65 = vector.load %arg6[%c16_31, %c0_32] : memref<32x128xf32, #tpu.memory_space<vmem>>, vector<8x128xf32>
    tpu.vector_store %arg6[%c16_31, %c0_32], %64 {strides = array<i32>} : memref<32x128xf32, #tpu.memory_space<vmem>>, vector<8x128xf32>,
    %c0_33 = arith.constant 0 : index
    %c0_34 = arith.constant 0 : index
    %66 = vector.load %arg3[%c0_33, %c0_34] : memref<8x32xf32, #tpu.memory_space<vmem>>, vector<8x32xf32>
    %c0_35 = arith.constant 0 : index
    %c0_36 = arith.constant 0 : index
    %67 = vector.load %arg6[%c0_35, %c0_36] : memref<32x128xf32, #tpu.memory_space<vmem>>, vector<32x128xf32>
    %cst_37 = arith.constant dense<0.000000e+00> : vector<8x128xf32>
    %68 = tpu.matmul %66, %67, %cst_37 {dimension_numbers = #tpu.dot_dimension_numbers<[1], [0], [0], [1], [0, 0, 1, 1], [], []>} : vector<8x32xf32>, vector<32x128xf32>, vector<8x128xf32> -> vector<8x128xf32>
    %cst_38 = arith.constant 0.000000e+00 : f32
    %69 = vector.broadcast %cst_38 : f32 to vector<8x128xf32>
    %70 = arith.maximumf %68, %69 : vector<8x128xf32>
    %71 = arith.addf %70, %48 : vector<8x128xf32>
    %cst_39 = arith.constant 0.000000e+00 : f32
    %72 = vector.broadcast %cst_39 : f32 to vector<8x128xf32>
    %73 = arith.maximumf %71, %72 : vector<8x128xf32>
    %c0_40 = arith.constant 0 : index
    %c0_41 = arith.constant 0 : index
    %74 = vector.load %arg4[%c0_40, %c0_41] : memref<8x128xf32, #tpu.memory_space<vmem>>, vector<8x128xf32>
    tpu.vector_store %arg4[%c0_40, %c0_41], %73 {strides = array<i32>} : memref<8x128xf32, #tpu.memory_space<vmem>>, vector<8x128xf32>,
    return
  }
  func.func @transform_0(%arg0: i32) -> (i32, i32) {
    %c0_i32 = arith.constant 0 : i32
    %c0_i32_0 = arith.constant 0 : i32
    return %c0_i32, %arg0 : i32, i32
  }
  func.func @transform_1(%arg0: i32) -> (i32, i32) {
    %c0_i32 = arith.constant 0 : i32
    %c0_i32_0 = arith.constant 0 : i32
    %c0_i32_1 = arith.constant 0 : i32
    return %c0_i32, %c0_i32_0 : i32, i32
  }
  func.func @transform_2(%arg0: i32) -> (i32, i32) {
    %c0_i32 = arith.constant 0 : i32
    %c0_i32_0 = arith.constant 0 : i32
    %c0_i32_1 = arith.constant 0 : i32
    return %c0_i32, %c0_i32_0 : i32, i32
  }
  func.func @transform_3(%arg0: i32) -> (i32, i32) {
    %c0_i32 = arith.constant 0 : i32
    %c0_i32_0 = arith.constant 0 : i32
    return %c0_i32, %arg0 : i32, i32
  }
}

</mosaic_0001>

<llo_original>
// kernel: temporal_block_pallas.1
$region0: #{temporal_block_pallas.1}
  #allocation0 [shape = 'u32[]', space=smem, size = 0x4, offset = 0x4, fixed_abs, tag = 'smem constant byte address 0x4 - core index']
  #allocation1 [shape = 'u32[144,128]{1,0:T(1,128)}', space=vmem, size = 0x12000, scoped, tag = 'internal scratch']
  #allocation2 [shape = 'f32[32,128]{1,0:T(8,128)}', space=vmem, size = 0x4000, scoped, tag = 'scratch operand']
  #allocation3 [shape = 'f32[32,128]{1,0:T(8,128)}', space=vmem, size = 0x4000, scoped, tag = 'scratch operand']
  %s0 = inlined_call_operand.vmem [shape: f32[8,256], index: 0, kind: input, shape index: {}]
  %s1 = inlined_call_operand.vmem [shape: f32[16,32], index: 1, kind: input, shape index: {}]
  %s2 = inlined_call_operand.vmem [shape: f32[8,32], index: 2, kind: input, shape index: {}]
  %s3 = inlined_call_operand.hbm [shape: f32[8,256], index: 3, kind: output, shape index: {}]
  %s4 = sld [smem:[#allocation0]]
  $region45: #{temporal_block_pallas.1} parent=0
    _
  %s6 = ssub.s32 1, %s4
  %s7 = scalar_select 0, %s6, %s4
  $region1: #{temporal_block_pallas.1} parent=0
    #allocation4 [shape = 'u8[8192]{0}', space=vmem, size = 0x2000, scoped, tag = 'output window, operand 0']
    #allocation5 [shape = 's32[2]{0}', space=sflag, size = 0x8, scoped, tag = 'scoped memory for temporal_block_pallas.1']
    %8 = vsyncpa [#allocation5], 0
    %s9 = scalar_lea.sflag [#allocation5], 1
    %10 = vsyncpa %s9, 0
    loop: start=0, step=1, limit=4
    $region2: #{temporal_block_pallas.1} parent=1 // loop_pre_header
      _
    $region3: #{temporal_block_pallas.1} parent=1 // loop_header
      %s12 = sphi 0, %s16
      %p13 = scmp.ge.s32.totalorder %s12, 4
      %s22 = sphi 0, %s24
      %s25 = sphi 0, %s22
      %s26 = sphi 0, %s25
      %s42 = sphi 0, %s26
      %s46 = sphi 0, %s46
      %s48 = sphi 0, %s46
      %s49 = sphi 0, %s48
      %s63 = sphi 0, %s49
      %s67 = sphi 0, %s67
      %s69 = sphi 0, %s67
      %s70 = sphi 0, %s69
      %s84 = sphi 0, %s70
      %s90 = sphi 0, %s92
      %s93 = sphi 0, %s90
      %s94 = sphi 0, %s93
      %s110 = sphi 0, %s94
    $region4: #{temporal_block_pallas.1} parent=1 // loop_header_branch
      %15 = sbr.rel (%p13) target = $region8
    $region5: #{temporal_block_pallas.1} parent=1 // loop_body
      %s17 = ssub.s32 %s12, 1
      %s18 = ssub.s32 %s12, 2
      %s19 = sadd.s32 %s12, 1
      %s20 = ssub.s32 %s12, %s19
      %p21 = scmp.eq.s32.totalorder %s20, 0
      %s23 = sadd.s32 %s22, 1
      %s24 = scalar_select %p21, %s22, %s23
      %p27 = pneg %p21
      %p28 = scmp.eq.s32.totalorder %s12, 1
      %p29 = por %p27, %p28
      %p30 = scmp.ne.s32.totalorder %s22, %s25
      %p31 = scmp.eq.s32.totalorder %s12, 0
      %p32 = por %p30, %p31
      %p33 = scmp.ne.s32.totalorder %s22, %s25
      %p34 = scmp.eq.s32.totalorder %s17, 1
      %p35 = por %p33, %p34
      %p36 = scmp.ne.s32.totalorder %s25, %s26
      %p37 = scmp.eq.s32.totalorder %s17, 0
      %p38 = por %p36, %p37
      %p39 = scmp.ne.s32.totalorder %s25, %s26
      %p40 = scmp.eq.s32.totalorder %s18, 1
      %p41 = por %p39, %p40
      %p43 = scmp.ne.s32.totalorder %s26, %s42
      %p44 = scmp.eq.s32.totalorder %s18, 0
      %p45 = por %p43, %p44
      %s47 = sadd.s32 %s46, 1
      %p50 = scmp.eq.s32.totalorder %s12, 1
      %p51 = scmp.ne.s32.totalorder %s46, %s48
      %p52 = scmp.eq.s32.totalorder %s12, 0
      %p53 = por %p51, %p52
      %p54 = scmp.ne.s32.totalorder %s46, %s48
      %p55 = scmp.eq.s32.totalorder %s17, 1
      %p56 = por %p54, %p55
      %p57 = scmp.ne.s32.totalorder %s48, %s49
      %p58 = scmp.eq.s32.totalorder %s17, 0
      %p59 = por %p57, %p58
      %p60 = scmp.ne.s32.totalorder %s48, %s49
      %p61 = scmp.eq.s32.totalorder %s18, 1
      %p62 = por %p60, %p61
      %p64 = scmp.ne.s32.totalorder %s49, %s63
      %p65 = scmp.eq.s32.totalorder %s18, 0
      %p66 = por %p64, %p65
      %s68 = sadd.s32 %s67, 1
      %p71 = scmp.eq.s32.totalorder %s12, 1
      %p72 = scmp.ne.s32.totalorder %s67, %s69
      %p73 = scmp.eq.s32.totalorder %s12, 0
      %p74 = por %p72, %p73
      %p75 = scmp.ne.s32.totalorder %s67, %s69
      %p76 = scmp.eq.s32.totalorder %s17, 1
      %p77 = por %p75, %p76
      %p78 = scmp.ne.s32.totalorder %s69, %s70
      %p79 = scmp.eq.s32.totalorder %s17, 0
      %p80 = por %p78, %p79
      %p81 = scmp.ne.s32.totalorder %s69, %s70
      %p82 = scmp.eq.s32.totalorder %s18, 1
      %p83 = por %p81, %p82
      %p85 = scmp.ne.s32.totalorder %s70, %s84
      %p86 = scmp.eq.s32.totalorder %s18, 0
      %p87 = por %p85, %p86
      %s88 = ssub.s32 %s12, %s19
      %p89 = scmp.eq.s32.totalorder %s88, 0
      %s91 = sadd.s32 %s90, 1
      %s92 = scalar_select %p89, %s90, %s91
      %p95 = pneg %p89
      %p96 = scmp.eq.s32.totalorder %s12, 1
      %p97 = por %p95, %p96
      %p98 = scmp.ne.s32.totalorder %s90, %s93
      %p99 = scmp.eq.s32.totalorder %s12, 0
      %p100 = por %p98, %p99
      %p101 = scmp.ne.s32.totalorder %s90, %s93
      %p102 = scmp.eq.s32.totalorder %s17, 1
      %p103 = por %p101, %p102
      %p104 = scmp.ne.s32.totalorder %s93, %s94
      %p105 = scmp.eq.s32.totalorder %s17, 0
      %p106 = por %p104, %p105
      %p107 = scmp.ne.s32.totalorder %s93, %s94
      %p108 = scmp.eq.s32.totalorder %s18, 1
      %p109 = por %p107, %p108
      %p111 = scmp.ne.s32.totalorder %s94, %s110
      %p112 = scmp.eq.s32.totalorder %s18, 0
      %p113 = por %p111, %p112
      %p114 = scmp.le.s32.totalorder 1, %s12
      %p115 = scmp.lt.s32.totalorder %s12, 3
      %p116 = pnand %p114, %p115
      %p117 = pneg %p116
      // Predicated region
      $region9: #{temporal_block_pallas.1} parent=5 // pred_check
        _
      $region10: #{temporal_block_pallas.1} parent=5 // pred_check_branch
        %119 = sbr.rel (%p116) target = $region12
      $region11: #{temporal_block_pallas.1} parent=5 // pred_region
        %s120 = ssub.s32 %s12, 1
        // Predicated region
        $region13: #{temporal_block_pallas.1} parent=11 // pred_check
          %p121 = pneg %p59
        $region14: #{temporal_block_pallas.1} parent=11 // pred_check_branch
          %123 = sbr.rel (%p121) target = $region16
        $region15: #{temporal_block_pallas.1} parent=11 // pred_region
          _
        $region16: #{temporal_block_pallas.1} parent=11 // pred_fallthru
          _
        // Predicated region
        $region17: #{temporal_block_pallas.1} parent=11 // pred_check
          %p124 = pneg %p80
        $region18: #{temporal_block_pallas.1} parent=11 // pred_check_branch
          %126 = sbr.rel (%p124) target = $region20
        $region19: #{temporal_block_pallas.1} parent=11 // pred_region
          _
        $region20: #{temporal_block_pallas.1} parent=11 // pred_fallthru
          _
      $region12: #{temporal_block_pallas.1} parent=5 // pred_fallthru
        _
      %p127 = scmp.lt.s32.totalorder %s12, 2
      // Predicated region
      $region21: #{temporal_block_pallas.1} parent=5 // pred_check
        %p128 = pneg %p127
      $region22: #{temporal_block_pallas.1} parent=5 // pred_check_branch
        %130 = sbr.rel (%p128) target = $region24
      $region23: #{temporal_block_pallas.1} parent=5 // pred_region
        // Predicated region
        $region25: #{temporal_block_pallas.1} parent=23 // pred_check
          %p131 = pneg %p32
        $region26: #{temporal_block_pallas.1} parent=23 // pred_check_branch
          %133 = sbr.rel (%p131) target = $region28
        $region27: #{temporal_block_pallas.1} parent=23 // pred_region
          %p134 = scmp.lt.s32.totalorder %s12, 1
          %s135 = scalar_select %p134, %s12, 1
          %s136 = smul.addr %s135, 8
          %s137 = scalar_lea.vmem %s0, %s136
        $region28: #{temporal_block_pallas.1} parent=23 // pred_fallthru
          _
      $region24: #{temporal_block_pallas.1} parent=5 // pred_fallthru
        _
      %p138 = scmp.le.s32.totalorder 1, %s12
      %p139 = scmp.lt.s32.totalorder %s12, 3
      %p140 = pnand %p138, %p139
      %p141 = pneg %p140
      // Predicated region
      $region29: #{temporal_block_pallas.1} parent=5 // pred_check
        _
      $region30: #{temporal_block_pallas.1} parent=5 // pred_check_branch
        %143 = sbr.rel (%p140) target = $region32
      $region31: #{temporal_block_pallas.1} parent=5 // pred_region
        %s144 = ssub.s32 %s12, 1
        %p145 = scmp.lt.s32.totalorder %s17, 1
        %s146 = scalar_select %p145, %s17, 1
        %s147 = smul.addr %s146, 8
        %s148 = scalar_lea.vmem %s0, %s147
        %p149 = pneg %p38
        %p150 = pneg %p35
        %p151 = pneg %p59
        %p152 = pneg %p56
        %p153 = pneg %p80
        %p154 = pneg %p77
        %p155 = pneg %p106
        %p156 = pneg %p103
        %s157 = sand.u32 %s93, 1
        %s158 = scalar_lea.sflag [#allocation5], %s157
        %s159 = sand.u32 %s93, 1
        %s160 = smul.addr %s159, 8
        %s161 = scalar_lea.vmem [#allocation4], %s160
        %p162 = scmp.lt.s32.totalorder %s17, 1
        %s163 = scalar_select %p162, %s17, 1
        %s164 = smul.addr %s163, 8
        %s165 = scalar_lea.vmem %s0, %s164
        %v166 = vld [vmem:[%s165] sm:$0xff]
        %v167 = vlaneseq
        %v168 = vand.u32 %v167, 127
        %vm169 = vcmp.lt.s32.totalorder %v168, 0
        %v170 = vsub.s32 0, %v168
        %v171 = vsel %vm169, %v170, %v168
        %v172 = vshrl.u32 %v171, 7
        %v173 = vand.u32 %v171, 127
        %v174 = vsub.s32 0, %v173
        %v175 = vsel %vm169, %v174, %v173
        %vm176 = vcmp.ne.s32.totalorder %v175, 0
        %vm177 = vcmp.lt.s32.totalorder %v175, 0
        %vm178 = vmand %vm177, %vm176
        %v179 = vadd.s32 %v175, 128
        %v180 = vsel %vm178, %v179, %v175
        %v181 = vlaneseq
        %v182 = vshrl.u32 %v181, 7
        %vm183 = vcmp.eq.s32.totalorder %v182, 0
        %v184 = vsel %vm183, 1, 0
        %v185 = vcvt.s32.f32 %v184
        %186 = vst [vmem:[#allocation2 + $0x18] sm:$0xff] %v185
        %187 = vst [vmem:[#allocation3 + $0x18] sm:$0xff] %v185
        %188 = vrot.lane.b32.xlu0 %v166, 2
        %v189 = vpop.permute.xlu0 %188
        %vm190 = vcmp.ge.s32.totalorder %v180, 2
        %v191 = vsel %vm190, 1, 0
        %vm192 = vcmp.eq.s32.totalorder %v191, 1
        %v193 = vsel %vm192, %v189, 0.0
        %194 = vst [vmem:[#allocation2] sm:$0xff] %v193
        %195 = vst [vmem:[#allocation2 + $0x8] sm:$0xff] %v166
        %196 = vrot.lane.b32.xlu0 %v166, 126
        %v197 = vpop.permute.xlu0 %196
        %vm198 = vcmp.lt.s32.totalorder %v180, 126
        %v199 = vsel %vm198, 1, 0
        %vm200 = vcmp.eq.s32.totalorder %v199, 1
        %v201 = vsel %vm200, %v197, 0.0
        %202 = vst [vmem:[#allocation2 + $0x10] sm:$0xff] %v201
        %v203 = vld [vmem:[%s1] sm:$0xff]
        %v204 = vld [vmem:[%s1 + $0x8] sm:$0xff]
        %v205 = vld [vmem:[#allocation2] sm:$0xff]
        %v206 = vld [vmem:[#allocation2 + $0x8] sm:$0xff]
        %v207 = vld [vmem:[#allocation2 + $0x10] sm:$0xff]
        %v208 = vld [vmem:[#allocation2 + $0x18] sm:$0xff]
        %vm209 = vcmask 261120
        %v211 = vsel %vm209, %v203, 0
        %v214 = vsel %vm209, %v204, 0
        %216 = vmatprep.subr.mxu0 0.0
        %217 = vmatpush1.msra.mxu0 0.0
        %218 = vmatprep.subr.mxu0 0.0
        %219 = vmatpush1.msra.mxu0 0.0
        %220 = vmatprep.subr.mxu0 0.0
        %221 = vmatpush1.msra.mxu0 0.0
        %222 = vmatprep.subr.mxu0 0.0
        %223 = vmatpush1.msra.mxu0 0.0
        %224 = vmatprep.subr.mxu0 0.0
        %225 = vmatpush1.msra.mxu0 0.0
        %226 = vmatprep.subr.mxu0 0.0
        %227 = vmatpush1.msra.mxu0 0.0
        %228 = vmatprep.subr.mxu0 0.0
        %229 = vmatpush1.msra.mxu0 0.0
        %230 = vmatprep.subr.mxu0 0.0
        %231 = vmatpush1.msra.mxu0 0.0
        %232 = vmatprep.subr.mxu0 0.0
        %233 = vmatpush1.msra.mxu0 0.0
        %234 = vmatprep.subr.mxu0 0.0
        %235 = vmatpush1.msra.mxu0 0.0
        %236 = vmatprep.subr.mxu0 0.0
        %237 = vmatpush1.msra.mxu0 0.0
        %238 = vmatprep.subr.mxu0 0.0
        %239 = vmatpush1.msra.mxu0 0.0
        %240 = vmatprep.subr.mxu0 0.0
        %241 = vmatpush1.msra.mxu0 %v208
        %242 = vmatprep.subr.mxu0 0.0
        %243 = vmatpush1.msra.mxu0 %v207
        %244 = vmatprep.subr.mxu0 0.0
        %245 = vmatpush1.msra.mxu0 %v206
        %246 = vmatprep.subr.mxu0 0.0
        %247 = vmatpush1.msra.mxu0 %v205
        %248 = vmatprep.subr.mxu0 0.0
        %249 = vmatpush2.msra.mxu0 0.0
        %250 = vmatprep.subr.mxu0 0.0
        %251 = vmatpush2.msra.mxu0 0.0
        %252 = vmatprep.subr.mxu0 0.0
        %253 = vmatpush2.msra.mxu0 0.0
        %254 = vmatprep.subr.mxu0 0.0
        %255 = vmatpush2.msra.mxu0 0.0
        %256 = vmatprep.subr.mxu0 0.0
        %257 = vmatpush2.msra.mxu0 0.0
        %258 = vmatprep.subr.mxu0 0.0
        %259 = vmatpush2.msra.mxu0 0.0
        %260 = vmatprep.subr.mxu0 0.0
        %261 = vmatpush2.msra.mxu0 0.0
        %262 = vmatprep.subr.mxu0 0.0
        %263 = vmatpush2.msra.mxu0 0.0
        %264 = vmatprep.subr.mxu0 0.0
        %265 = vmatpush2.msra.mxu0 0.0
        %266 = vmatprep.subr.mxu0 0.0
        %267 = vmatpush2.msra.mxu0 0.0
        %268 = vmatprep.subr.mxu0 0.0
        %269 = vmatpush2.msra.mxu0 0.0
        %270 = vmatprep.subr.mxu0 0.0
        %271 = vmatpush2.msra.mxu0 0.0
        %272 = vmatprep.subr.mxu0 0.0
        %273 = vmatpush2.msra.mxu0 0.0
        %274 = vmatprep.subr.mxu0 0.0
        %275 = vmatpush2.msra.mxu0 0.0
        %276 = vmatprep.subr.mxu0 0.0
        %277 = vmatpush2.msra.mxu0 0.0
        %278 = vmatprep.subr.mxu0 0.0
        %279 = vmatpush2.msra.mxu0 0.0
        %280 = vmatprep.mubr.f32.mxu0 0.0
        %281 = vmatmul.mubr.f32.gmra.mxu0 %v211
        %v282 = vpop.f32.mrf.mxu0
        %v283 = vadd.f32 0.0, %v282
        %v284 = vpop.f32.mrf.mxu0
        %285 = vmatprep.mubr.f32.mxu0 0.0
        %286 = vmatmul.mubr.f32.gmra.mxu0 %v214
        %v287 = vpop.f32.mrf.mxu0
        %v288 = vadd.f32 0.0, %v287
        %v289 = vpop.f32.mrf.mxu0
        %290 = vdwg.mxu0
        %v291 = vmax.f32 %v283, 0.0
        %292 = vrot.lane.b32.xlu0 %v291, 2
        %v293 = vpop.permute.xlu0 %292
        %v294 = vsel %vm192, %v293, 0.0
        %295 = vst [vmem:[#allocation3] sm:$0xff] %v294
        %296 = vst [vmem:[#allocation3 + $0x8] sm:$0xff] %v291
        %297 = vrot.lane.b32.xlu0 %v291, 126
        %v298 = vpop.permute.xlu0 %297
        %v299 = vsel %vm200, %v298, 0.0
        %300 = vst [vmem:[#allocation3 + $0x10] sm:$0xff] %v299
        %v301 = vld [vmem:[%s2] sm:$0xff]
        %v302 = vld [vmem:[#allocation3] sm:$0xff]
        %v303 = vld [vmem:[#allocation3 + $0x8] sm:$0xff]
        %v304 = vld [vmem:[#allocation3 + $0x10] sm:$0xff]
        %v305 = vld [vmem:[#allocation3 + $0x18] sm:$0xff]
        %v307 = vsel %vm209, %v301, 0
        %309 = vmatprep.subr.mxu0 0.0
        %310 = vmatpush1.msra.mxu0 0.0
        %311 = vmatprep.subr.mxu0 0.0
        %312 = vmatpush1.msra.mxu0 0.0
        %313 = vmatprep.subr.mxu0 0.0
        %314 = vmatpush1.msra.mxu0 0.0
        %315 = vmatprep.subr.mxu0 0.0
        %316 = vmatpush1.msra.mxu0 0.0
        %317 = vmatprep.subr.mxu0 0.0
        %318 = vmatpush1.msra.mxu0 0.0
        %319 = vmatprep.subr.mxu0 0.0
        %320 = vmatpush1.msra.mxu0 0.0
        %321 = vmatprep.subr.mxu0 0.0
        %322 = vmatpush1.msra.mxu0 0.0
        %323 = vmatprep.subr.mxu0 0.0
        %324 = vmatpush1.msra.mxu0 0.0
        %325 = vmatprep.subr.mxu0 0.0
        %326 = vmatpush1.msra.mxu0 0.0
        %327 = vmatprep.subr.mxu0 0.0
        %328 = vmatpush1.msra.mxu0 0.0
        %329 = vmatprep.subr.mxu0 0.0
        %330 = vmatpush1.msra.mxu0 0.0
        %331 = vmatprep.subr.mxu0 0.0
        %332 = vmatpush1.msra.mxu0 0.0
        %333 = vmatprep.subr.mxu0 0.0
        %334 = vmatpush1.msra.mxu0 %v305
        %335 = vmatprep.subr.mxu0 0.0
        %336 = vmatpush1.msra.mxu0 %v304
        %337 = vmatprep.subr.mxu0 0.0
        %338 = vmatpush1.msra.mxu0 %v303
        %339 = vmatprep.subr.mxu0 0.0
        %340 = vmatpush1.msra.mxu0 %v302
        %341 = vmatprep.subr.mxu0 0.0
        %342 = vmatpush2.msra.mxu0 0.0
        %343 = vmatprep.subr.mxu0 0.0
        %344 = vmatpush2.msra.mxu0 0.0
        %345 = vmatprep.subr.mxu0 0.0
        %346 = vmatpush2.msra.mxu0 0.0
        %347 = vmatprep.subr.mxu0 0.0
        %348 = vmatpush2.msra.mxu0 0.0
        %349 = vmatprep.subr.mxu0 0.0
        %350 = vmatpush2.msra.mxu0 0.0
        %351 = vmatprep.subr.mxu0 0.0
        %352 = vmatpush2.msra.mxu0 0.0
        %353 = vmatprep.subr.mxu0 0.0
        %354 = vmatpush2.msra.mxu0 0.0
        %355 = vmatprep.subr.mxu0 0.0
        %356 = vmatpush2.msra.mxu0 0.0
        %357 = vmatprep.subr.mxu0 0.0
        %358 = vmatpush2.msra.mxu0 0.0
        %359 = vmatprep.subr.mxu0 0.0
        %360 = vmatpush2.msra.mxu0 0.0
        %361 = vmatprep.subr.mxu0 0.0
        %362 = vmatpush2.msra.mxu0 0.0
        %363 = vmatprep.subr.mxu0 0.0
        %364 = vmatpush2.msra.mxu0 0.0
        %365 = vmatprep.subr.mxu0 0.0
        %366 = vmatpush2.msra.mxu0 0.0
        %367 = vmatprep.subr.mxu0 0.0
        %368 = vmatpush2.msra.mxu0 0.0
        %369 = vmatprep.subr.mxu0 0.0
        %370 = vmatpush2.msra.mxu0 0.0
        %371 = vmatprep.subr.mxu0 0.0
        %372 = vmatpush2.msra.mxu0 0.0
        %373 = vmatprep.mubr.f32.mxu0 0.0
        %374 = vmatmul.mubr.f32.gmra.mxu0 %v307
        %v375 = vpop.f32.mrf.mxu0
        %v376 = vadd.f32 0.0, %v375
        %v377 = vpop.f32.mrf.mxu0
        %378 = vdwg.mxu0
        %v379 = vmax.f32 %v376, 0.0
        %v380 = vadd.f32 %v379, %v288
        %v381 = vmax.f32 %v380, 0.0
        %382 = vst [vmem:[%s161] sm:$0xff] %v381
        %s383 = sand.u32 %s93, 1
        %s384 = scalar_lea.sflag [#allocation5], %s383
        %s385 = sand.u32 %s93, 1
        %s386 = smul.addr %s385, 8
        %s387 = scalar_lea.vmem [#allocation4], %s386
        // Predicated region
        $region33: #{temporal_block_pallas.1} parent=31 // pred_check
          %p388 = pneg %p103
        $region34: #{temporal_block_pallas.1} parent=31 // pred_check_branch
          %390 = sbr.rel (%p388) target = $region36
        $region35: #{temporal_block_pallas.1} parent=31 // pred_region
          %s392 = ssub.s32 128, 128
          %393 = vsyncadd %s384, %s392
          %s394 = smul.addr %s17, 128
          %s395 = scalar_lea.hbm %s3, %s394
          %s397 = sshll.u32 %s387, 4
          %s398 = int_to_ptr.vmem [resolvable:$true] %s397
          %400 = dma.vmem_to_hbm [thread:$0]  %s398, 128, %s395, %s384
        $region36: #{temporal_block_pallas.1} parent=31 // pred_fallthru
          _
      $region32: #{temporal_block_pallas.1} parent=5 // pred_fallthru
        _
      %p401 = scmp.le.s32.totalorder 2, %s12
      // Predicated region
      $region37: #{temporal_block_pallas.1} parent=5 // pred_check
        %p402 = pneg %p401
      $region38: #{temporal_block_pallas.1} parent=5 // pred_check_branch
        %404 = sbr.rel (%p402) target = $region40
      $region39: #{temporal_block_pallas.1} parent=5 // pred_region
        %s405 = ssub.s32 %s12, 2
        // Predicated region
        $region41: #{temporal_block_pallas.1} parent=39 // pred_check
          %p406 = pneg %p109
        $region42: #{temporal_block_pallas.1} parent=39 // pred_check_branch
          %408 = sbr.rel (%p406) target = $region44
        $region43: #{temporal_block_pallas.1} parent=39 // pred_region
          %s409 = sand.u32 %s94, 1
          %s410 = scalar_lea.sflag [#allocation5], %s409
          %s411 = sand.u32 %s94, 1
          %s412 = smul.addr %s411, 8
          %s413 = scalar_lea.vmem [#allocation4], %s412
          %414 = dma.done %s410, 128
        $region44: #{temporal_block_pallas.1} parent=39 // pred_fallthru
          _
      $region40: #{temporal_block_pallas.1} parent=5 // pred_fallthru
        _
    $region6: #{temporal_block_pallas.1} parent=1 // loop_footer
      %s16 = sadd.s32 1, %s12
    $region7: #{temporal_block_pallas.1} parent=1 // loop_footer_branch
      %11 = sbr.rel target = $region3
    $region8: #{temporal_block_pallas.1} parent=1 // loop_exit
      _
    %415 = vsyncpa [#allocation5], 1
    %s416 = scalar_lea.sflag [#allocation5], 1
    %417 = vsyncpa %s416, 1

</llo_original>
